<compile_context>
chip_gen: v7x
topology: tpu7x:2x2x1
jax: 0.10.0
libtpu: 0.0.40
codegen_flags: <defaults>
</compile_context>

<pallas_src>
import functools

import jax
import jax.numpy as jnp
from jax.experimental import pallas as pl
from jax.experimental.pallas import tpu as pltpu  # noqa: F401  (TPU backend)

LANE = 128  # vreg lane width; final output is padded to a multiple of this.


def _ffn_fused_kernel(*refs, n_layers):
    """refs = (x_ref, w1_ref, b1_ref, ..., wL_ref, bL_ref, o_ref).

    Entire network in one body: intermediates never leave the chip.
    """
    x_ref, o_ref = refs[0], refs[-1]
    h = x_ref[...]
    for l in range(n_layers):
        w_ref = refs[1 + 2 * l]
        b_ref = refs[2 + 2 * l]
        # NOTE: at realistic widths, cast h / w to bf16 here (keep
        # preferred_element_type=f32) for ~2x MXU throughput; at these tiny
        # shapes it makes no measurable difference.
        h = jnp.dot(h, w_ref[...], preferred_element_type=jnp.float32)
        h = h + b_ref[...]                      # b is (1, D_out) -> broadcasts
        if l < n_layers - 1:
            h = jnp.maximum(h, 0.0)             # ReLU; Dropout(p=0) == identity
        else:
            # sigmoid = 1 / (1 + exp(-h)); exp and the approximate reciprocal
            # both run in the EUP slot, keeping the divide off the VALU.
            e = jnp.exp(-h)
            h = pl.reciprocal(1.0 + e, approx=True)
    o_ref[...] = h.astype(o_ref.dtype)


def ffn_forward(x, params):
    """Forward pass matching FFN.forward with p=0 dropout.

    x:      [B, D_in] float32
    params: list of (W [D_in, D_out], b [1, D_out]) float32 pairs.
    """
    n_layers = len(params)
    B = x.shape[0]
    d_out = params[-1][0].shape[1]
    # Lane-dense output: pad the last layer's output features to a multiple of
    # 128 so the single HBM store is an unmasked vst; slice outside the kernel.
    d_pad = LANE * pl.cdiv(d_out, LANE)
    w_last, b_last = params[-1]
    w_last_p = jnp.zeros((w_last.shape[0], d_pad), w_last.dtype).at[:, :d_out].set(w_last)
    b_last_p = jnp.zeros((1, d_pad), b_last.dtype).at[:, :d_out].set(b_last)
    padded = list(params[:-1]) + [(w_last_p, b_last_p)]

    flat_args = [x]
    for w, b in padded:
        flat_args.append(w)
        flat_args.append(b)

    kernel = functools.partial(_ffn_fused_kernel, n_layers=n_layers)
    # Single invocation, no grid: every operand is one whole block in VMEM,
    # no prefetch/pipelining scaffolding needed at these sizes.
    out_padded = pl.pallas_call(
        kernel,
        out_shape=jax.ShapeDtypeStruct((B, d_pad), jnp.float32),
    )(*flat_args)
    return out_padded[:, :d_out]


def init_ffn_params(key, layers):
    """Deterministic init mimicking nn.Linear defaults: U(-1/sqrt(fan_in), ...)."""
    params = []
    for d_in, d_out in zip(layers, layers[1:]):
        key, kw, kb = jax.random.split(key, 3)
        bound = 1.0 / (d_in ** 0.5)
        # stored as (D_in, D_out) == transpose of PyTorch's (D_out, D_in)
        w = jax.random.uniform(kw, (d_in, d_out), jnp.float32, -bound, bound)
        b = jax.random.uniform(kb, (1, d_out), jnp.float32, -bound, bound)
        params.append((w, b))
    return params


if __name__ == "__main__":
    # Small shapes consistent with the module: Layers = [32, 64, 16], batch = 8.
    layers = [32, 64, 16]
    batch = 8

    key = jax.random.PRNGKey(0)
    key, kx = jax.random.split(key)
    x = jax.random.normal(kx, (batch, layers[0]), jnp.float32)
    params = init_ffn_params(key, layers)

    fwd = jax.jit(ffn_forward)
    out = jax.block_until_ready(fwd(x, params))

    # Reference check in plain JAX (exact f32 sigmoid). The kernel uses the
    # EUP approximate reciprocal, hence the slightly relaxed tolerance.
    ref = x
    for l, (w, b) in enumerate(params):
        ref = ref @ w + b
        if l < len(params) - 1:
            ref = jnp.maximum(ref, 0.0)
        else:
            ref = 1.0 / (1.0 + jnp.exp(-ref))
    assert out.shape == (batch, layers[-1])
    assert jnp.allclose(out, ref, atol=2e-3, rtol=2e-3), float(jnp.max(jnp.abs(out - ref)))

    print("KERNEL_OK")
</pallas_src>

<mosaic_0001>
module attributes {stable_mosaic.version = 11 : i64} {
  func.func @_ffn_fused_kernel(%arg0: memref<8x32xf32, #tpu.memory_space<vmem>>, %arg1: memref<32x64xf32, #tpu.memory_space<vmem>>, %arg2: memref<1x64xf32, #tpu.memory_space<vmem>>, %arg3: memref<64x128xf32, #tpu.memory_space<vmem>>, %arg4: memref<1x128xf32, #tpu.memory_space<vmem>>, %arg5: memref<8x128xf32, #tpu.memory_space<vmem>>) attributes {dimension_semantics = [], scalar_prefetch = 0 : i64, scratch_operands = 0 : i64, tpu.core_type = #tpu.core_type<tc>} {
    %c0 = arith.constant 0 : index
    %c0_0 = arith.constant 0 : index
    %0 = vector.load %arg0[%c0, %c0_0] : memref<8x32xf32, #tpu.memory_space<vmem>>, vector<8x32xf32>
    %c0_1 = arith.constant 0 : index
    %c0_2 = arith.constant 0 : index
    %1 = vector.load %arg1[%c0_1, %c0_2] : memref<32x64xf32, #tpu.memory_space<vmem>>, vector<32x64xf32>
    %cst = arith.constant dense<0.000000e+00> : vector<8x64xf32>
    %2 = tpu.matmul %0, %1, %cst {dimension_numbers = #tpu.dot_dimension_numbers<[1], [0], [0], [1], [0, 0, 1, 1], [], []>} : vector<8x32xf32>, vector<32x64xf32>, vector<8x64xf32> -> vector<8x64xf32>
    %c0_3 = arith.constant 0 : index
    %c0_4 = arith.constant 0 : index
    %3 = vector.load %arg2[%c0_3, %c0_4] : memref<1x64xf32, #tpu.memory_space<vmem>>, vector<1x64xf32>
    %4 = vector.broadcast %3 : vector<1x64xf32> to vector<8x64xf32>
    %5 = arith.addf %2, %4 : vector<8x64xf32>
    %cst_5 = arith.constant 0.000000e+00 : f32
    %6 = vector.broadcast %cst_5 : f32 to vector<8x64xf32>
    %7 = arith.maximumf %5, %6 : vector<8x64xf32>
    %c0_6 = arith.constant 0 : index
    %c0_7 = arith.constant 0 : index
    %8 = vector.load %arg3[%c0_6, %c0_7] : memref<64x128xf32, #tpu.memory_space<vmem>>, vector<64x128xf32>
    %cst_8 = arith.constant dense<0.000000e+00> : vector<8x128xf32>
    %9 = tpu.matmul %7, %8, %cst_8 {dimension_numbers = #tpu.dot_dimension_numbers<[1], [0], [0], [1], [0, 0, 1, 1], [], []>} : vector<8x64xf32>, vector<64x128xf32>, vector<8x128xf32> -> vector<8x128xf32>
    %c0_9 = arith.constant 0 : index
    %c0_10 = arith.constant 0 : index
    %10 = vector.load %arg4[%c0_9, %c0_10] : memref<1x128xf32, #tpu.memory_space<vmem>>, vector<1x128xf32>
    %11 = vector.broadcast %10 : vector<1x128xf32> to vector<8x128xf32>
    %12 = arith.addf %9, %11 : vector<8x128xf32>
    %cst_11 = arith.constant 0.000000e+00 : f32
    %13 = vector.broadcast %cst_11 : f32 to vector<8x128xf32>
    %14 = arith.subf %13, %12 : vector<8x128xf32>
    %15 = math.exp %14 : vector<8x128xf32>
    %cst_12 = arith.constant 1.000000e+00 : f32
    %16 = vector.broadcast %cst_12 : f32 to vector<8x128xf32>
    %17 = arith.addf %16, %15 : vector<8x128xf32>
    %18 = tpu.reciprocal %17 {approx = true} : vector<8x128xf32> -> vector<8x128xf32>
    %c0_13 = arith.constant 0 : index
    %c0_14 = arith.constant 0 : index
    %19 = vector.load %arg5[%c0_13, %c0_14] : memref<8x128xf32, #tpu.memory_space<vmem>>, vector<8x128xf32>
    tpu.vector_store %arg5[%c0_13, %c0_14], %18 {strides = array<i32>} : memref<8x128xf32, #tpu.memory_space<vmem>>, vector<8x128xf32>,
    return
  }
}

</mosaic_0001>

<llo_original>
// kernel: ffn_forward.1
$region0: #{ffn_forward.1}
  #allocation0 [shape = 'u32[]', space=smem, size = 0x4, offset = 0x4, fixed_abs, tag = 'smem constant byte address 0x4 - core index']
  #allocation1 [shape = 'u32[144,128]{1,0:T(1,128)}', space=vmem, size = 0x12000, scoped, tag = 'internal scratch']
  %s0 = inlined_call_operand.vmem [shape: f32[8,32], index: 0, kind: input, shape index: {}]
  %s1 = inlined_call_operand.vmem [shape: f32[32,64], index: 1, kind: input, shape index: {}]
  %s2 = inlined_call_operand.vmem [shape: f32[1,64], index: 2, kind: input, shape index: {}]
  %s3 = inlined_call_operand.vmem [shape: f32[64,128], index: 3, kind: input, shape index: {}]
  %s4 = inlined_call_operand.vmem [shape: f32[1,128], index: 4, kind: input, shape index: {}]
  %s5 = inlined_call_operand.hbm [shape: f32[8,128], index: 5, kind: output, shape index: {}]
  %s6 = sld [smem:[#allocation0]]
  $region30: #{ffn_forward.1} parent=0
    _
  %s8 = ssub.s32 1, %s6
  %s9 = scalar_select 0, %s8, %s6
  $region1: #{ffn_forward.1} parent=0
    #allocation2 [shape = 'u8[4096]{0}', space=vmem, size = 0x1000, scoped, tag = 'output window, operand 0, single buffered']
    #allocation3 [shape = 's32[1]{0}', space=sflag, size = 0x4, scoped, tag = 'scoped memory for ffn_forward.1']
    %10 = vsyncpa [#allocation3], 0
    // Predicated region
    $region2: #{ffn_forward.1} parent=1 // pred_check
      _
    $region3: #{ffn_forward.1} parent=1 // pred_check_branch
      %12 = sbr.rel (0) target = $region5
    $region4: #{ffn_forward.1} parent=1 // pred_region
      _
    $region5: #{ffn_forward.1} parent=1 // pred_fallthru
      _
    // Predicated region
    $region6: #{ffn_forward.1} parent=1 // pred_check
      _
    $region7: #{ffn_forward.1} parent=1 // pred_check_branch
      %14 = sbr.rel (0) target = $region9
    $region8: #{ffn_forward.1} parent=1 // pred_region
      _
    $region9: #{ffn_forward.1} parent=1 // pred_fallthru
      _
    // Predicated region
    $region10: #{ffn_forward.1} parent=1 // pred_check
      _
    $region11: #{ffn_forward.1} parent=1 // pred_check_branch
      %16 = sbr.rel (0) target = $region13
    $region12: #{ffn_forward.1} parent=1 // pred_region
      _
    $region13: #{ffn_forward.1} parent=1 // pred_fallthru
      _
    // Predicated region
    $region14: #{ffn_forward.1} parent=1 // pred_check
      _
    $region15: #{ffn_forward.1} parent=1 // pred_check_branch
      %18 = sbr.rel (0) target = $region17
    $region16: #{ffn_forward.1} parent=1 // pred_region
      _
    $region17: #{ffn_forward.1} parent=1 // pred_fallthru
      _
    // Predicated region
    $region18: #{ffn_forward.1} parent=1 // pred_check
      _
    $region19: #{ffn_forward.1} parent=1 // pred_check_branch
      %20 = sbr.rel (0) target = $region21
    $region20: #{ffn_forward.1} parent=1 // pred_region
      _
    $region21: #{ffn_forward.1} parent=1 // pred_fallthru
      _
    %v21 = vld [vmem:[%s0] sm:$0xff]
    %v22 = vld [vmem:[%s1] sm:$0xff]
    %v23 = vld [vmem:[%s1 + $0x8] sm:$0xff]
    %v24 = vld [vmem:[%s1 + $0x10] sm:$0xff]
    %v25 = vld [vmem:[%s1 + $0x18] sm:$0xff]
    %v26 = vld [vmem:[%s2] sm:$0x1]
    %v28 = vlaneseq
    %v29 = vshrl.u32 %v28, 7
    %v30 = vsub.s32 0, %v29
    %v31 = vrot.slane %v26, %v30
    %vm33 = vcmask 261120
    %v35 = vsel %vm33, %v21, 0
    %37 = vmatprep.subr.mxu0 0.0
    %38 = vmatpush1.msra.mxu0 %v22
    %39 = vmatprep.subr.mxu0 0.0
    %40 = vmatpush1.msra.mxu0 %v23
    %41 = vmatprep.subr.mxu0 0.0
    %42 = vmatpush1.msra.mxu0 %v24
    %43 = vmatprep.subr.mxu0 0.0
    %44 = vmatpush1.msra.mxu0 %v25
    %45 = vmatprep.subr.mxu0 0.0
    %46 = vmatpush1.msra.mxu0 0.0
    %47 = vmatprep.subr.mxu0 0.0
    %48 = vmatpush1.msra.mxu0 0.0
    %49 = vmatprep.subr.mxu0 0.0
    %50 = vmatpush1.msra.mxu0 0.0
    %51 = vmatprep.subr.mxu0 0.0
    %52 = vmatpush1.msra.mxu0 0.0
    %53 = vmatprep.subr.mxu0 0.0
    %54 = vmatpush1.msra.mxu0 0.0
    %55 = vmatprep.subr.mxu0 0.0
    %56 = vmatpush1.msra.mxu0 0.0
    %57 = vmatprep.subr.mxu0 0.0
    %58 = vmatpush1.msra.mxu0 0.0
    %59 = vmatprep.subr.mxu0 0.0
    %60 = vmatpush1.msra.mxu0 0.0
    %61 = vmatprep.subr.mxu0 0.0
    %62 = vmatpush1.msra.mxu0 0.0
    %63 = vmatprep.subr.mxu0 0.0
    %64 = vmatpush1.msra.mxu0 0.0
    %65 = vmatprep.subr.mxu0 0.0
    %66 = vmatpush1.msra.mxu0 0.0
    %67 = vmatprep.subr.mxu0 0.0
    %68 = vmatpush1.msra.mxu0 0.0
    %69 = vmatprep.subr.mxu0 0.0
    %70 = vmatpush1.msra.mxu0 0.0
    %71 = vmatprep.subr.mxu0 0.0
    %72 = vmatpush1.msra.mxu0 0.0
    %73 = vmatprep.subr.mxu0 0.0
    %74 = vmatpush1.msra.mxu0 0.0
    %75 = vmatprep.subr.mxu0 0.0
    %76 = vmatpush1.msra.mxu0 0.0
    %77 = vmatprep.subr.mxu0 0.0
    %78 = vmatpush1.msra.mxu0 0.0
    %79 = vmatprep.subr.mxu0 0.0
    %80 = vmatpush1.msra.mxu0 0.0
    %81 = vmatprep.subr.mxu0 0.0
    %82 = vmatpush1.msra.mxu0 0.0
    %83 = vmatprep.subr.mxu0 0.0
    %84 = vmatpush1.msra.mxu0 0.0
    %85 = vmatprep.subr.mxu0 0.0
    %86 = vmatpush1.msra.mxu0 0.0
    %87 = vmatprep.subr.mxu0 0.0
    %88 = vmatpush1.msra.mxu0 0.0
    %89 = vmatprep.subr.mxu0 0.0
    %90 = vmatpush1.msra.mxu0 0.0
    %91 = vmatprep.subr.mxu0 0.0
    %92 = vmatpush1.msra.mxu0 0.0
    %93 = vmatprep.subr.mxu0 0.0
    %94 = vmatpush1.msra.mxu0 0.0
    %95 = vmatprep.subr.mxu0 0.0
    %96 = vmatpush1.msra.mxu0 0.0
    %97 = vmatprep.subr.mxu0 0.0
    %98 = vmatpush1.msra.mxu0 0.0
    %99 = vmatprep.subr.mxu0 0.0
    %100 = vmatpush1.msra.mxu0 0.0
    %101 = vmatprep.mubr.f32.mxu0 0.0
    %102 = vmatmul.mubr.f32.gmra.mrb[0].mxu0 %v35
    %v103 = vpop.f32.mrb[0].mxu0
    %v104 = vadd.f32 %v31, %v103
    %v105 = vpop.f32.mrb[0].mxu0
    %106 = vdwg.mxu0
    %v107 = vmax.f32 %v104, 0.0
    %v108 = vld [vmem:[%s3] sm:$0xff]
    %v109 = vld [vmem:[%s3 + $0x8] sm:$0xff]
    %v110 = vld [vmem:[%s3 + $0x10] sm:$0xff]
    %v111 = vld [vmem:[%s3 + $0x18] sm:$0xff]
    %v112 = vld [vmem:[%s3 + $0x20] sm:$0xff]
    %v113 = vld [vmem:[%s3 + $0x28] sm:$0xff]
    %v114 = vld [vmem:[%s3 + $0x30] sm:$0xff]
    %v115 = vld [vmem:[%s3 + $0x38] sm:$0xff]
    %v116 = vld [vmem:[%s4] sm:$0x1]
    %v118 = vlaneseq
    %v119 = vshrl.u32 %v118, 7
    %v120 = vsub.s32 0, %v119
    %v121 = vrot.slane %v116, %v120
    %vm123 = vcmask 523264
    %v125 = vsel %vm123, %v107, 0
    %127 = vmatprep.subr.mxu0 0.0
    %128 = vmatpush1.msra.mxu0 %v108
    %129 = vmatprep.subr.mxu0 0.0
    %130 = vmatpush1.msra.mxu0 %v109
    %131 = vmatprep.subr.mxu0 0.0
    %132 = vmatpush1.msra.mxu0 %v110
    %133 = vmatprep.subr.mxu0 0.0
    %134 = vmatpush1.msra.mxu0 %v111
    %135 = vmatprep.subr.mxu0 0.0
    %136 = vmatpush1.msra.mxu0 %v112
    %137 = vmatprep.subr.mxu0 0.0
    %138 = vmatpush1.msra.mxu0 %v113
    %139 = vmatprep.subr.mxu0 0.0
    %140 = vmatpush1.msra.mxu0 %v114
    %141 = vmatprep.subr.mxu0 0.0
    %142 = vmatpush1.msra.mxu0 %v115
    %143 = vmatprep.subr.mxu0 0.0
    %144 = vmatpush1.msra.mxu0 0.0
    %145 = vmatprep.subr.mxu0 0.0
    %146 = vmatpush1.msra.mxu0 0.0
    %147 = vmatprep.subr.mxu0 0.0
    %148 = vmatpush1.msra.mxu0 0.0
    %149 = vmatprep.subr.mxu0 0.0
    %150 = vmatpush1.msra.mxu0 0.0
    %151 = vmatprep.subr.mxu0 0.0
    %152 = vmatpush1.msra.mxu0 0.0
    %153 = vmatprep.subr.mxu0 0.0
    %154 = vmatpush1.msra.mxu0 0.0
    %155 = vmatprep.subr.mxu0 0.0
    %156 = vmatpush1.msra.mxu0 0.0
    %157 = vmatprep.subr.mxu0 0.0
    %158 = vmatpush1.msra.mxu0 0.0
    %159 = vmatprep.subr.mxu0 0.0
    %160 = vmatpush1.msra.mxu0 0.0
    %161 = vmatprep.subr.mxu0 0.0
    %162 = vmatpush1.msra.mxu0 0.0
    %163 = vmatprep.subr.mxu0 0.0
    %164 = vmatpush1.msra.mxu0 0.0
    %165 = vmatprep.subr.mxu0 0.0
    %166 = vmatpush1.msra.mxu0 0.0
    %167 = vmatprep.subr.mxu0 0.0
    %168 = vmatpush1.msra.mxu0 0.0
    %169 = vmatprep.subr.mxu0 0.0
    %170 = vmatpush1.msra.mxu0 0.0
    %171 = vmatprep.subr.mxu0 0.0
    %172 = vmatpush1.msra.mxu0 0.0
    %173 = vmatprep.subr.mxu0 0.0
    %174 = vmatpush1.msra.mxu0 0.0
    %175 = vmatprep.subr.mxu0 0.0
    %176 = vmatpush1.msra.mxu0 0.0
    %177 = vmatprep.subr.mxu0 0.0
    %178 = vmatpush1.msra.mxu0 0.0
    %179 = vmatprep.subr.mxu0 0.0
    %180 = vmatpush1.msra.mxu0 0.0
    %181 = vmatprep.subr.mxu0 0.0
    %182 = vmatpush1.msra.mxu0 0.0
    %183 = vmatprep.subr.mxu0 0.0
    %184 = vmatpush1.msra.mxu0 0.0
    %185 = vmatprep.subr.mxu0 0.0
    %186 = vmatpush1.msra.mxu0 0.0
    %187 = vmatprep.subr.mxu0 0.0
    %188 = vmatpush1.msra.mxu0 0.0
    %189 = vmatprep.subr.mxu0 0.0
    %190 = vmatpush1.msra.mxu0 0.0
    %191 = vmatprep.mubr.f32.mxu0 0.0
    %192 = vmatmul.mubr.f32.gmra.mrb[0].mxu0 %v125
    %v193 = vpop.f32.mrb[0].mxu0
    %v194 = vadd.f32 %v121, %v193
    %v195 = vpop.f32.mrb[0].mxu0
    %196 = vdwg.mxu0
    %v197 = vsub.f32 0.0, %v194
    %v198 = vmul.f32 %v197, 1.442695
    %v199 = vpow.pop %v198
    %v200 = vadd.f32 %v199, 1.0
    %v201 = vrcp.pop %v200
    %202 = vst [vmem:[#allocation2] sm:$0xff] %v201
    // Predicated region
    $region22: #{ffn_forward.1} parent=1 // pred_check
      _
    $region23: #{ffn_forward.1} parent=1 // pred_check_branch
      %204 = sbr.rel (0) target = $region25
    $region24: #{ffn_forward.1} parent=1 // pred_region
      %s206 = ssub.s32 128, 128
      %207 = vsyncadd [#allocation3], %s206
      %s209 = sshll.u32 [#allocation2], 4
      %s210 = int_to_ptr.vmem [resolvable:$true] %s209
      %212 = dma.vmem_to_hbm [thread:$0]  %s210, 128, %s5, [#allocation3]
    $region25: #{ffn_forward.1} parent=1 // pred_fallthru
      _
    // Predicated region
    $region26: #{ffn_forward.1} parent=1 // pred_check
      _
    $region27: #{ffn_forward.1} parent=1 // pred_check_branch
      %214 = sbr.rel (0) target = $region29
    $region28: #{ffn_forward.1} parent=1 // pred_region
      %215 = dma.done [#allocation3], 128
    $region29: #{ffn_forward.1} parent=1 // pred_fallthru
      _
    %216 = vsyncpa [#allocation3], 1

</llo_original>
